<compile_context>
chip_gen: v7x
topology: tpu7x:2x2x1
jax: 0.10.0
libtpu: 0.0.40
codegen_flags: <defaults>
</compile_context>

<pallas_src>
import jax
import jax.numpy as jnp
from jax.experimental import pallas as pl
from jax.experimental.pallas import tpu as pltpu


# ------------------------------------------------------------------ kernel --
def corridor_kernel(x_ref, w1_ref, b1_ref, wh_ref, bh_ref, out_ref):
    # x_ref  : (TB, D)     bf16 observation tile
    # w1_ref : (D, H)      bf16 fc1 weight (stored transposed vs. PyTorch)
    # b1_ref : (1, H)      f32  fc1 bias
    # wh_ref : (H, NOUT)   bf16 fused [action_head | critic_head | pad] weight
    # bh_ref : (1, NOUT)   f32  fused head bias
    # out_ref: (TB, NOUT)  bf16 fused output slab
    h = jnp.dot(x_ref[...], w1_ref[...], preferred_element_type=jnp.float32)
    h = jnp.maximum(h + b1_ref[...], 0.0)                       # bias + ReLU on VPU
    out = jnp.dot(h.astype(jnp.bfloat16), wh_ref[...],
                  preferred_element_type=jnp.float32) + bh_ref[...]
    out_ref[...] = out.astype(out_ref.dtype)


# ---------------------------------------------------------------- helpers ---
def _round_up(n, m):
    return ((n + m - 1) // m) * m


def _batch_tiling(batch, tb_target=2048):
    """Pick (tile_rows, padded_batch, num_tiles).

    >= 2 tiles whenever batch >= 16 (megacore on v7x), even tile count for a
    balanced split, per-tile padding bounded by the sublane granule (8 rows).
    """
    b8 = _round_up(batch, 8)
    if b8 <= 8:
        return b8, b8, 1                       # too small to split
    n = max(2, pl.cdiv(b8, tb_target))         # >= 2 tiles -> both TCs on v7x
    if n % 2:
        n += 1                                 # even tile count -> balanced megacore
    tb = _round_up(pl.cdiv(b8, n), 8)
    return tb, n * tb, n


# ---------------------------------------------------------------- wrapper ---
def corridor_net_forward(x, packed_params, action_n, *, tb_target=2048):
    """Returns (action_logits [B, A], value_out [B]) — matches
    CorridorNet.forward plus value_function() (value reshaped to [-1])."""
    w1p, b1p, whp, bhp = packed_params
    D, H = w1p.shape                 # obs features, hidden (128)
    NOUT = whp.shape[1]              # fused head width (8 for action_n=4)
    assert action_n + 1 <= NOUT, "fused head width too small for action_n + value"

    B, Dx = x.shape
    assert Dx == D, f"expected obs dim {D}, got {Dx}"

    tb, b_pad, n_tiles = _batch_tiling(B, tb_target)
    x_bf = x.astype(jnp.bfloat16)
    if b_pad != B:
        # Padded rows compute garbage; they are sliced off below.
        x_bf = jnp.pad(x_bf, ((0, b_pad - B), (0, 0)))

    flops = 2 * b_pad * D * H + 2 * b_pad * H * NOUT
    bytes_accessed = (2 * (b_pad * D + D * H + H * NOUT + b_pad * NOUT)  # bf16
                      + 4 * (H + NOUT))                                  # f32 biases

    out = pl.pallas_call(
        corridor_kernel,
        out_shape=jax.ShapeDtypeStruct((b_pad, NOUT), jnp.bfloat16),
        grid_spec=pl.GridSpec(
            grid=(n_tiles,),
            in_specs=[
                pl.BlockSpec((tb, D), lambda i: (i, 0)),      # x tile
                pl.BlockSpec((D, H), lambda i: (0, 0)),       # fc1 weight
                pl.BlockSpec((1, H), lambda i: (0, 0)),       # fc1 bias
                pl.BlockSpec((H, NOUT), lambda i: (0, 0)),    # fused head weight
                pl.BlockSpec((1, NOUT), lambda i: (0, 0)),    # fused head bias
            ],
            out_specs=pl.BlockSpec((tb, NOUT), lambda i: (i, 0)),
        ),
        compiler_params=pltpu.CompilerParams(
            dimension_semantics=("parallel",),
        ),
        cost_estimate=pl.CostEstimate(
            flops=flops, transcendentals=0, bytes_accessed=bytes_accessed
        ),
    )(x_bf, w1p, b1p, whp, bhp)

    action = out[:B, :action_n].astype(jnp.float32)
    value = out[:B, action_n].astype(jnp.float32)
    return action, value


# ------------------------------------------------------------------- init ---
def init_params(key, obs_n, action_n, hidden=128):
    """Deterministic init mimicking nn.Linear's uniform(-1/sqrt(fan_in), ...)."""
    in_dim = obs_n * 2 - 1
    k = jax.random.split(key, 6)

    def uni(k_, shape, fan_in):
        bound = 1.0 / jnp.sqrt(jnp.asarray(fan_in, jnp.float32))
        return jax.random.uniform(k_, shape, jnp.float32, -bound, bound)

    w1 = uni(k[0], (in_dim, hidden), in_dim)        # fc1.weight.T
    b1 = uni(k[1], (hidden,), in_dim)               # fc1.bias
    wa = uni(k[2], (hidden, action_n), hidden)      # action_head.weight.T
    ba = uni(k[3], (action_n,), hidden)             # action_head.bias
    wc = uni(k[4], (hidden, 1), hidden)             # critic_head.weight.T
    bc = uni(k[5], (1,), hidden)                    # critic_head.bias
    return (w1, b1, wa, ba, wc, bc)


def pack_params(params, nout=None):
    """One-time repacking of the 6 PyTorch-style tensors into 4 kernel inputs.

    Heads are fused lane-wise: cols [0:A) = action logits, col A = value,
    remaining cols zero.  Weights go to bf16 (f32 accumulation in-kernel),
    biases stay f32 (negligible bytes).
    """
    w1, b1, wa, ba, wc, bc = params
    in_dim, hidden = w1.shape
    action_n = wa.shape[1]
    if nout is None:
        nout = max(8, pl.next_power_of_2(action_n + 1))
    assert action_n + 1 <= nout, "nout must hold action logits + value"

    w1p = w1.astype(jnp.bfloat16)                           # (D, H)
    b1p = b1.reshape(1, hidden).astype(jnp.float32)         # (1, H)

    whp = jnp.zeros((hidden, nout), jnp.float32)
    whp = whp.at[:, :action_n].set(wa)
    whp = whp.at[:, action_n].set(wc[:, 0])
    whp = whp.astype(jnp.bfloat16)                          # (H, NOUT)

    bhp = jnp.zeros((1, nout), jnp.float32)
    bhp = bhp.at[0, :action_n].set(ba)
    bhp = bhp.at[0, action_n].set(bc[0])                    # (1, NOUT)
    return (w1p, b1p, whp, bhp)


# -------------------------------------------------------------------- main --
if __name__ == "__main__":
    key = jax.random.PRNGKey(0)
    obs_n = 8          # obs_space.n  -> input dim = 2*8 - 1 = 15
    action_n = 4       # action_space.n

    pkey, xkey1, xkey2 = jax.random.split(key, 3)
    params = init_params(pkey, obs_n, action_n)
    packed = pack_params(params)
    w1, b1, wa, ba, wc, bc = params

    def reference(x):
        h = jnp.maximum(x @ w1 + b1[None, :], 0.0)
        act = h @ wa + ba[None, :]
        val = (h @ wc + bc[None, :]).reshape([-1])
        return act, val

    ok = True
    for batch, xkey in ((8, xkey1), (100, xkey2)):   # single-tile and multi-tile paths
        x = jax.random.uniform(xkey, (batch, obs_n * 2 - 1), jnp.float32)
        action, value = corridor_net_forward(x, packed, action_n)
        jax.block_until_ready((action, value))

        act_ref, val_ref = reference(x)
        ok &= action.shape == (batch, action_n)
        ok &= value.shape == (batch,)
        # bf16 I/O + bf16 MXU passes -> bf16-level tolerance vs. f32 reference.
        ok &= bool(jnp.allclose(action, act_ref, atol=3e-2, rtol=3e-2))
        ok &= bool(jnp.allclose(value, val_ref, atol=3e-2, rtol=3e-2))

    assert ok, "kernel output mismatch vs. reference"
    print("KERNEL_OK")
</pallas_src>

<mosaic_0001>
module attributes {stable_mosaic.version = 11 : i64} {
  func.func @corridor_kernel(%arg0: i32, %arg1: memref<8x15xbf16, #tpu.memory_space<vmem>>, %arg2: memref<15x128xbf16, #tpu.memory_space<vmem>>, %arg3: memref<1x128xf32, #tpu.memory_space<vmem>>, %arg4: memref<128x8xbf16, #tpu.memory_space<vmem>>, %arg5: memref<1x8xf32, #tpu.memory_space<vmem>>, %arg6: memref<8x8xbf16, #tpu.memory_space<vmem>>) attributes {dimension_semantics = [#tpu.dimension_semantics<parallel>], iteration_bounds = array<i64: 1>, scalar_prefetch = 0 : i64, scratch_operands = 0 : i64, tpu.core_type = #tpu.core_type<tc>, window_params = [{transform_indices = @transform_0, window_bounds = array<i64: 8, 15>}, {pipeline_mode = #tpu.pipeline_mode<synchronous>, transform_indices = @transform_1, window_bounds = array<i64: 15, 128>}, {pipeline_mode = #tpu.pipeline_mode<synchronous>, transform_indices = @transform_2, window_bounds = array<i64: 1, 128>}, {pipeline_mode = #tpu.pipeline_mode<synchronous>, transform_indices = @transform_3, window_bounds = array<i64: 128, 8>}, {pipeline_mode = #tpu.pipeline_mode<synchronous>, transform_indices = @transform_4, window_bounds = array<i64: 1, 8>}, {transform_indices = @transform_5, window_bounds = array<i64: 8, 8>}]} {
    %c0 = arith.constant 0 : index
    %c0_0 = arith.constant 0 : index
    %0 = vector.load %arg1[%c0, %c0_0] : memref<8x15xbf16, #tpu.memory_space<vmem>>, vector<8x15xbf16>
    %c0_1 = arith.constant 0 : index
    %c0_2 = arith.constant 0 : index
    %1 = vector.load %arg2[%c0_1, %c0_2] : memref<15x128xbf16, #tpu.memory_space<vmem>>, vector<15x128xbf16>
    %cst = arith.constant dense<0.000000e+00> : vector<8x128xf32>
    %2 = tpu.matmul %0, %1, %cst {dimension_numbers = #tpu.dot_dimension_numbers<[1], [0], [0], [1], [0, 0, 1, 1], [], []>} : vector<8x15xbf16>, vector<15x128xbf16>, vector<8x128xf32> -> vector<8x128xf32>
    %c0_3 = arith.constant 0 : index
    %c0_4 = arith.constant 0 : index
    %3 = vector.load %arg3[%c0_3, %c0_4] : memref<1x128xf32, #tpu.memory_space<vmem>>, vector<1x128xf32>
    %4 = vector.broadcast %3 : vector<1x128xf32> to vector<8x128xf32>
    %5 = arith.addf %2, %4 : vector<8x128xf32>
    %cst_5 = arith.constant 0.000000e+00 : f32
    %6 = vector.broadcast %cst_5 : f32 to vector<8x128xf32>
    %7 = arith.maximumf %5, %6 : vector<8x128xf32>
    %8 = arith.truncf %7 : vector<8x128xf32> to vector<8x128xbf16>
    %c0_6 = arith.constant 0 : index
    %c0_7 = arith.constant 0 : index
    %9 = vector.load %arg4[%c0_6, %c0_7] : memref<128x8xbf16, #tpu.memory_space<vmem>>, vector<128x8xbf16>
    %cst_8 = arith.constant dense<0.000000e+00> : vector<8x8xf32>
    %10 = tpu.matmul %8, %9, %cst_8 {dimension_numbers = #tpu.dot_dimension_numbers<[1], [0], [0], [1], [0, 0, 1, 1], [], []>} : vector<8x128xbf16>, vector<128x8xbf16>, vector<8x8xf32> -> vector<8x8xf32>
    %c0_9 = arith.constant 0 : index
    %c0_10 = arith.constant 0 : index
    %11 = vector.load %arg5[%c0_9, %c0_10] : memref<1x8xf32, #tpu.memory_space<vmem>>, vector<1x8xf32>
    %12 = vector.broadcast %11 : vector<1x8xf32> to vector<8x8xf32>
    %13 = arith.addf %10, %12 : vector<8x8xf32>
    %14 = arith.truncf %13 : vector<8x8xf32> to vector<8x8xbf16>
    %c0_11 = arith.constant 0 : index
    %c0_12 = arith.constant 0 : index
    %15 = vector.load %arg6[%c0_11, %c0_12] : memref<8x8xbf16, #tpu.memory_space<vmem>>, vector<8x8xbf16>
    tpu.vector_store %arg6[%c0_11, %c0_12], %14 {strides = array<i32>} : memref<8x8xbf16, #tpu.memory_space<vmem>>, vector<8x8xbf16>,
    return
  }
  func.func @transform_0(%arg0: i32) -> (i32, i32) {
    %c0_i32 = arith.constant 0 : i32
    %c0_i32_0 = arith.constant 0 : i32
    return %arg0, %c0_i32 : i32, i32
  }
  func.func @transform_1(%arg0: i32) -> (i32, i32) {
    %c0_i32 = arith.constant 0 : i32
    %c0_i32_0 = arith.constant 0 : i32
    %c0_i32_1 = arith.constant 0 : i32
    return %c0_i32, %c0_i32_0 : i32, i32
  }
  func.func @transform_2(%arg0: i32) -> (i32, i32) {
    %c0_i32 = arith.constant 0 : i32
    %c0_i32_0 = arith.constant 0 : i32
    %c0_i32_1 = arith.constant 0 : i32
    return %c0_i32, %c0_i32_0 : i32, i32
  }
  func.func @transform_3(%arg0: i32) -> (i32, i32) {
    %c0_i32 = arith.constant 0 : i32
    %c0_i32_0 = arith.constant 0 : i32
    %c0_i32_1 = arith.constant 0 : i32
    return %c0_i32, %c0_i32_0 : i32, i32
  }
  func.func @transform_4(%arg0: i32) -> (i32, i32) {
    %c0_i32 = arith.constant 0 : i32
    %c0_i32_0 = arith.constant 0 : i32
    %c0_i32_1 = arith.constant 0 : i32
    return %c0_i32, %c0_i32_0 : i32, i32
  }
  func.func @transform_5(%arg0: i32) -> (i32, i32) {
    %c0_i32 = arith.constant 0 : i32
    %c0_i32_0 = arith.constant 0 : i32
    return %arg0, %c0_i32 : i32, i32
  }
}

</mosaic_0001>

<llo_original>
// kernel: tpu_custom_call.1
$region0: #{tpu_custom_call.1}
  #allocation0 [shape = 'u32[]', space=smem, size = 0x4, offset = 0x4, fixed_abs, tag = 'smem constant byte address 0x4 - core index']
  #allocation1 [shape = 'u32[144,128]{1,0:T(1,128)}', space=vmem, size = 0x12000, scoped, tag = 'internal scratch']
  %s0 = inlined_call_operand.vmem [shape: bf16[8,15], index: 0, kind: input, shape index: {}]
  %s1 = inlined_call_operand.vmem [shape: bf16[15,128], index: 1, kind: input, shape index: {}]
  %s2 = inlined_call_operand.vmem [shape: f32[1,128], index: 2, kind: input, shape index: {}]
  %s3 = inlined_call_operand.vmem [shape: bf16[128,8], index: 3, kind: input, shape index: {}]
  %s4 = inlined_call_operand.vmem [shape: f32[1,8], index: 4, kind: input, shape index: {}]
  %s5 = inlined_call_operand.hbm [shape: bf16[8,8], index: 5, kind: output, shape index: {}]
  %s6 = sld [smem:[#allocation0]]
  $region30: #{tpu_custom_call.1} parent=0
    _
  %s8 = ssub.s32 1, %s6
  %s9 = scalar_select 0, %s8, %s6
  $region1: #{tpu_custom_call.1} parent=0
    #allocation2 [shape = 'u8[2048]{0}', space=vmem, size = 0x800, scoped, tag = 'output window, operand 0, single buffered']
    #allocation3 [shape = 's32[1]{0}', space=sflag, size = 0x4, scoped, tag = 'scoped memory for tpu_custom_call.1']
    %10 = vsyncpa [#allocation3], 0
    // Predicated region
    $region2: #{tpu_custom_call.1} parent=1 // pred_check
      _
    $region3: #{tpu_custom_call.1} parent=1 // pred_check_branch
      %12 = sbr.rel (0) target = $region5
    $region4: #{tpu_custom_call.1} parent=1 // pred_region
      _
    $region5: #{tpu_custom_call.1} parent=1 // pred_fallthru
      _
    // Predicated region
    $region6: #{tpu_custom_call.1} parent=1 // pred_check
      _
    $region7: #{tpu_custom_call.1} parent=1 // pred_check_branch
      %14 = sbr.rel (0) target = $region9
    $region8: #{tpu_custom_call.1} parent=1 // pred_region
      _
    $region9: #{tpu_custom_call.1} parent=1 // pred_fallthru
      _
    // Predicated region
    $region10: #{tpu_custom_call.1} parent=1 // pred_check
      _
    $region11: #{tpu_custom_call.1} parent=1 // pred_check_branch
      %16 = sbr.rel (0) target = $region13
    $region12: #{tpu_custom_call.1} parent=1 // pred_region
      _
    $region13: #{tpu_custom_call.1} parent=1 // pred_fallthru
      _
    // Predicated region
    $region14: #{tpu_custom_call.1} parent=1 // pred_check
      _
    $region15: #{tpu_custom_call.1} parent=1 // pred_check_branch
      %18 = sbr.rel (0) target = $region17
    $region16: #{tpu_custom_call.1} parent=1 // pred_region
      _
    $region17: #{tpu_custom_call.1} parent=1 // pred_fallthru
      _
    // Predicated region
    $region18: #{tpu_custom_call.1} parent=1 // pred_check
      _
    $region19: #{tpu_custom_call.1} parent=1 // pred_check_branch
      %20 = sbr.rel (0) target = $region21
    $region20: #{tpu_custom_call.1} parent=1 // pred_region
      _
    $region21: #{tpu_custom_call.1} parent=1 // pred_fallthru
      _
    %v22 = vld [vmem:[%s0] sm:$0xf]
    %v23 = vld [vmem:[%s1] sm:$0xf]
    %v24 = vld [vmem:[%s1 + $0x4] sm:$0xf]
    %v25 = vld [vmem:[%s2] sm:$0x1]
    %v27 = vlaneseq
    %v28 = vshrl.u32 %v27, 7
    %v29 = vsub.s32 0, %v28
    %v30 = vrot.slane %v25, %v29
    %v34 = vunpack.c.l.b16 %v23
    %v35 = vunpack.c.l.b16 %v24
    %v36 = vpack.c.b16 %v35, %v34
    %vm37 = vcmask 121856
    %v39 = vsel %vm37, %v22, 0
    %vm41 = vcmask 1046528
    %vm42 = vcmask 1047552
    %v43 = vsel %vm41, 4294967295, 65535
    %v44 = vsel %vm42, %v43, 0
    %v46 = vand.u32 %v36, %v44
    %48 = vmatprep.subr.bf16.mxu0 0
    %49 = vmatpush1.bf16.msra.mxu0 %v46
    %50 = vmatprep.subr.bf16.mxu0 0
    %51 = vmatpush1.bf16.msra.mxu0 0
    %52 = vmatprep.subr.bf16.mxu0 0
    %53 = vmatpush1.bf16.msra.mxu0 0
    %54 = vmatprep.subr.bf16.mxu0 0
    %55 = vmatpush1.bf16.msra.mxu0 0
    %56 = vmatprep.subr.bf16.mxu0 0
    %57 = vmatpush1.bf16.msra.mxu0 0
    %58 = vmatprep.subr.bf16.mxu0 0
    %59 = vmatpush1.bf16.msra.mxu0 0
    %60 = vmatprep.subr.bf16.mxu0 0
    %61 = vmatpush1.bf16.msra.mxu0 0
    %62 = vmatprep.subr.bf16.mxu0 0
    %63 = vmatpush1.bf16.msra.mxu0 0
    %64 = vmatprep.subr.bf16.mxu0 0
    %65 = vmatpush1.bf16.msra.mxu0 0
    %66 = vmatprep.subr.bf16.mxu0 0
    %67 = vmatpush1.bf16.msra.mxu0 0
    %68 = vmatprep.subr.bf16.mxu0 0
    %69 = vmatpush1.bf16.msra.mxu0 0
    %70 = vmatprep.subr.bf16.mxu0 0
    %71 = vmatpush1.bf16.msra.mxu0 0
    %72 = vmatprep.subr.bf16.mxu0 0
    %73 = vmatpush1.bf16.msra.mxu0 0
    %74 = vmatprep.subr.bf16.mxu0 0
    %75 = vmatpush1.bf16.msra.mxu0 0
    %76 = vmatprep.subr.bf16.mxu0 0
    %77 = vmatpush1.bf16.msra.mxu0 0
    %78 = vmatprep.subr.bf16.mxu0 0
    %79 = vmatpush1.bf16.msra.mxu0 0
    %80 = vmatprep.mubr.bf16.mxu0 0
    %81 = vmatmul.mubr.bf16.gmra.mrb[0].mxu0 %v39
    %v82 = vpop.f32.mrb[0].mxu0
    %v83 = vadd.f32 %v30, %v82
    %v84 = vpop.f32.mrb[0].mxu0
    %v85 = vpop.f32.mrb[0].mxu0
    %v86 = vpop.f32.mrb[0].mxu0
    %87 = vdwg.mxu0
    %v88 = vmax.f32 %v83, 0.0
    %v89 = vpack.c.bf16 %v88, %v88
    %v90 = vld [vmem:[%s3] sm:$0xf]
    %v91 = vld [vmem:[%s3 + $0x4] sm:$0xf]
    %v92 = vld [vmem:[%s3 + $0x8] sm:$0xf]
    %v93 = vld [vmem:[%s3 + $0xc] sm:$0xf]
    %v94 = vld [vmem:[%s3 + $0x10] sm:$0xf]
    %v95 = vld [vmem:[%s3 + $0x14] sm:$0xf]
    %v96 = vld [vmem:[%s3 + $0x18] sm:$0xf]
    %v97 = vld [vmem:[%s3 + $0x1c] sm:$0xf]
    %v98 = vld [vmem:[%s3 + $0x20] sm:$0xf]
    %v99 = vld [vmem:[%s3 + $0x24] sm:$0xf]
    %v100 = vld [vmem:[%s3 + $0x28] sm:$0xf]
    %v101 = vld [vmem:[%s3 + $0x2c] sm:$0xf]
    %v102 = vld [vmem:[%s3 + $0x30] sm:$0xf]
    %v103 = vld [vmem:[%s3 + $0x34] sm:$0xf]
    %v104 = vld [vmem:[%s3 + $0x38] sm:$0xf]
    %v105 = vld [vmem:[%s3 + $0x3c] sm:$0xf]
    %v106 = vld [vmem:[%s4] sm:$0x1]
    %v108 = vlaneseq
    %v109 = vshrl.u32 %v108, 7
    %v110 = vsub.s32 0, %v109
    %v111 = vrot.slane %v106, %v110
    %v129 = vunpack.c.l.b16 %v90
    %v130 = vunpack.c.l.b16 %v91
    %v131 = vunpack.c.l.b16 %v92
    %v132 = vunpack.c.l.b16 %v93
    %v133 = vunpack.c.l.b16 %v94
    %v134 = vunpack.c.l.b16 %v95
    %v135 = vunpack.c.l.b16 %v96
    %v136 = vunpack.c.l.b16 %v97
    %v137 = vunpack.c.l.b16 %v98
    %v138 = vunpack.c.l.b16 %v99
    %v139 = vunpack.c.l.b16 %v100
    %v140 = vunpack.c.l.b16 %v101
    %v141 = vunpack.c.l.b16 %v102
    %v142 = vunpack.c.l.b16 %v103
    %v143 = vunpack.c.l.b16 %v104
    %v144 = vunpack.c.l.b16 %v105
    %v145 = vpack.c.b16 %v130, %v129
    %v146 = vpack.c.b16 %v132, %v131
    %v147 = vpack.c.b16 %v134, %v133
    %v148 = vpack.c.b16 %v136, %v135
    %v149 = vpack.c.b16 %v138, %v137
    %v150 = vpack.c.b16 %v140, %v139
    %v151 = vpack.c.b16 %v142, %v141
    %v152 = vpack.c.b16 %v144, %v143
    %161 = vmatprep.subr.bf16.mxu0 0
    %162 = vmatpush1.bf16.msra.mxu0 %v145
    %163 = vmatprep.subr.bf16.mxu0 0
    %164 = vmatpush1.bf16.msra.mxu0 %v146
    %165 = vmatprep.subr.bf16.mxu0 0
    %166 = vmatpush1.bf16.msra.mxu0 %v147
    %167 = vmatprep.subr.bf16.mxu0 0
    %168 = vmatpush1.bf16.msra.mxu0 %v148
    %169 = vmatprep.subr.bf16.mxu0 0
    %170 = vmatpush1.bf16.msra.mxu0 %v149
    %171 = vmatprep.subr.bf16.mxu0 0
    %172 = vmatpush1.bf16.msra.mxu0 %v150
    %173 = vmatprep.subr.bf16.mxu0 0
    %174 = vmatpush1.bf16.msra.mxu0 %v151
    %175 = vmatprep.subr.bf16.mxu0 0
    %176 = vmatpush1.bf16.msra.mxu0 %v152
    %177 = vmatprep.subr.bf16.mxu0 0
    %178 = vmatpush1.bf16.msra.mxu0 0
    %179 = vmatprep.subr.bf16.mxu0 0
    %180 = vmatpush1.bf16.msra.mxu0 0
    %181 = vmatprep.subr.bf16.mxu0 0
    %182 = vmatpush1.bf16.msra.mxu0 0
    %183 = vmatprep.subr.bf16.mxu0 0
    %184 = vmatpush1.bf16.msra.mxu0 0
    %185 = vmatprep.subr.bf16.mxu0 0
    %186 = vmatpush1.bf16.msra.mxu0 0
    %187 = vmatprep.subr.bf16.mxu0 0
    %188 = vmatpush1.bf16.msra.mxu0 0
    %189 = vmatprep.subr.bf16.mxu0 0
    %190 = vmatpush1.bf16.msra.mxu0 0
    %191 = vmatprep.subr.bf16.mxu0 0
    %192 = vmatpush1.bf16.msra.mxu0 0
    %193 = vmatprep.mubr.bf16.mxu0 0
    %194 = vmatmul.mubr.bf16.gmra.mrb[0].mxu0 %v89
    %v195 = vpop.f32.mrb[0].mxu0
    %v196 = vadd.f32 %v111, %v195
    %v197 = vpop.f32.mrb[0].mxu0
    %v198 = vpop.f32.mrb[0].mxu0
    %v199 = vpop.f32.mrb[0].mxu0
    %200 = vdwg.mxu0
    %v201 = vpack.c.bf16 %v196, %v196
    %vm202 = vcmask 60416
    %203 = vst.msk [vmem:[#allocation2] sm:$0xf] %vm202, %v201
    // Predicated region
    $region22: #{tpu_custom_call.1} parent=1 // pred_check
      _
    $region23: #{tpu_custom_call.1} parent=1 // pred_check_branch
      %205 = sbr.rel (0) target = $region25
    $region24: #{tpu_custom_call.1} parent=1 // pred_region
      %s207 = ssub.s32 64, 64
      %208 = vsyncadd [#allocation3], %s207
      %s210 = sshll.u32 [#allocation2], 4
      %s211 = int_to_ptr.vmem [resolvable:$true] %s210
      %213 = dma.vmem_to_hbm [thread:$0]  %s211, 64, %s5, [#allocation3]
    $region25: #{tpu_custom_call.1} parent=1 // pred_fallthru
      _
    // Predicated region
    $region26: #{tpu_custom_call.1} parent=1 // pred_check
      _
    $region27: #{tpu_custom_call.1} parent=1 // pred_check_branch
      %215 = sbr.rel (0) target = $region29
    $region28: #{tpu_custom_call.1} parent=1 // pred_region
      %216 = dma.done [#allocation3], 64
    $region29: #{tpu_custom_call.1} parent=1 // pred_fallthru
      _
    %217 = vsyncpa [#allocation3], 1

</llo_original>
